<compile_context>
chip_gen: v7x
topology: tpu7x:2x2x1
jax: 0.10.0
libtpu: 0.0.40
codegen_flags: <defaults>
</compile_context>

<pallas_src>
import functools

import jax
import jax.numpy as jnp
from jax.experimental import pallas as pl
from jax.experimental.pallas import tpu as pltpu


# ----------------------------- kernel -------------------------------------- #

def _norm_image_kernel(fac_ref, mean_ref, x_ref, o_ref):
    # fac_ref / mean_ref: SMEM (C,) f32 scalars; channel = grid axis 1.
    # x_ref / o_ref: one dense (1, 1, S_TILE, 128) tile (or the fallback
    # (1, 1, 1, T) tile); compute in f32, write back in the caller's dtype.
    c = pl.program_id(1)
    x = x_ref[...].astype(jnp.float32)
    o_ref[...] = (x * fac_ref[c] + mean_ref[c]).astype(o_ref.dtype)


# ----------------------------- wrapper -------------------------------------- #

@functools.partial(jax.jit, static_argnames=("block_bytes",))
def norm_image(x_nchw, fac, mean, *, block_bytes=4 << 20):
    """PyTorch Norm_Image.forward: inputs * fac + mean (NCHW layout)."""
    N, C, H, W = x_nchw.shape
    HW = H * W
    dtype = x_nchw.dtype
    itemsize = jnp.dtype(dtype).itemsize

    # Tiny (C,) scalar tables ride in SMEM via scalar prefetch.
    fac1 = fac.reshape(C).astype(jnp.float32)
    mean1 = mean.reshape(C).astype(jnp.float32)

    if HW % 128 == 0:
        # Preferred dense path: 128 lanes, S_TILE sublane rows per block.
        rows = HW // 128
        x4 = x_nchw.reshape(N, C, rows, 128)           # free reinterpretation
        rows_budget = max(8, (block_bytes // (128 * itemsize)) // 8 * 8)
        s_tile = rows if rows <= rows_budget else rows_budget
        n_tiles = pl.cdiv(rows, s_tile)
        block = (1, 1, s_tile, 128)
    else:
        # Fallback for non-lane-aligned spatial extents: HW on the lane axis.
        x4 = x_nchw.reshape(N, C, 1, HW)
        lane_budget = max(128, (block_bytes // itemsize) // 128 * 128)
        hw_tile = HW if HW <= lane_budget else lane_budget
        n_tiles = pl.cdiv(HW, hw_tile)
        block = (1, 1, 1, hw_tile)

    grid = (N, C, n_tiles)
    idx_map = lambda n, c, t, fac_s, mean_s: (n, c, t, 0)

    out = pl.pallas_call(
        _norm_image_kernel,
        out_shape=jax.ShapeDtypeStruct(x4.shape, dtype),
        grid_spec=pltpu.PrefetchScalarGridSpec(
            num_scalar_prefetch=2,
            grid=grid,
            in_specs=[pl.BlockSpec(block, idx_map)],
            out_specs=pl.BlockSpec(block, idx_map),
        ),
        compiler_params=pltpu.CompilerParams(
            # Fully independent blocks -> megacore sharding on v7x.
            dimension_semantics=("parallel", "parallel", "parallel"),
            # Double-buffered in+out blocks (<= ~16 MiB) fit comfortably; 32 MiB
            # is safe on v5e/v6e (128 MiB) and v7x (64 MiB physical).
            vmem_limit_bytes=32 * 1024 * 1024,
        ),
        cost_estimate=pl.CostEstimate(
            flops=2 * N * C * HW,
            transcendentals=0,
            bytes_accessed=2 * N * C * HW * itemsize,
        ),
    )(fac1, mean1, x4)

    return out.reshape(N, C, H, W)


# ------------------------- module parameters -------------------------------- #

def make_norm_params(mean_in=(0.0, 0.0, 0.0), std_in=(1.0, 1.0, 1.0)):
    """Exactly mirrors Norm_Image.__init__ (PyTorch defaults mean_in=0, std_in=1)."""
    imagenet_std = jnp.array([0.229, 0.224, 0.225], jnp.float32)
    imagenet_mean = jnp.array([0.485, 0.456, 0.406], jnp.float32)
    mean = (jnp.array(mean_in, jnp.float32) - imagenet_mean) / imagenet_std
    fac = jnp.array(std_in, jnp.float32) / imagenet_std
    return fac, mean


# --------------------------------- main -------------------------------------- #

if __name__ == "__main__":
    key = jax.random.PRNGKey(0)
    # PyTorch-convention NCHW input; C must be 3 for this module.
    x = jax.random.uniform(key, (2, 3, 16, 16), jnp.float32)
    fac, mean = make_norm_params()  # defaults: mean_in=[0,0,0], std_in=[1,1,1]

    out = norm_image(x, fac, mean)
    jax.block_until_ready(out)

    ref = x * fac.reshape(1, 3, 1, 1) + mean.reshape(1, 3, 1, 1)
    assert out.shape == x.shape and out.dtype == x.dtype
    assert jnp.allclose(out, ref, atol=1e-6, rtol=1e-6)

    # bf16 I/O preserved end-to-end (halves HBM traffic; compute stays f32).
    out_bf16 = norm_image(x.astype(jnp.bfloat16), fac, mean)
    jax.block_until_ready(out_bf16)
    assert out_bf16.dtype == jnp.bfloat16
    assert jnp.allclose(out_bf16.astype(jnp.float32), ref, atol=3e-2)

    # Non-128-aligned spatial extent exercises the fallback layout path.
    x_odd = jax.random.uniform(jax.random.PRNGKey(0), (1, 3, 10, 10), jnp.float32)
    out_odd = norm_image(x_odd, fac, mean)
    jax.block_until_ready(out_odd)
    ref_odd = x_odd * fac.reshape(1, 3, 1, 1) + mean.reshape(1, 3, 1, 1)
    assert jnp.allclose(out_odd, ref_odd, atol=1e-6, rtol=1e-6)

    print("KERNEL_OK")
</pallas_src>

<mosaic_0001>
module attributes {stable_mosaic.version = 11 : i64} {
  func.func @_norm_image_kernel(%arg0: i32, %arg1: i32, %arg2: i32, %arg3: memref<3xf32, #tpu.memory_space<smem>>, %arg4: memref<3xf32, #tpu.memory_space<smem>>, %arg5: memref<1x1x2x128xf32, #tpu.memory_space<vmem>>, %arg6: memref<1x1x2x128xf32, #tpu.memory_space<vmem>>) attributes {dimension_semantics = [#tpu.dimension_semantics<parallel>, #tpu.dimension_semantics<parallel>, #tpu.dimension_semantics<parallel>], iteration_bounds = array<i64: 2, 3, 1>, scalar_prefetch = 2 : i64, scratch_operands = 0 : i64, tpu.core_type = #tpu.core_type<tc>, window_params = [{transform_indices = @transform_0, window_bounds = array<i64: 1, 1, 2, 128>}, {transform_indices = @transform_1, window_bounds = array<i64: 1, 1, 2, 128>}]} {
    %c0 = arith.constant 0 : index
    %c0_0 = arith.constant 0 : index
    %c0_1 = arith.constant 0 : index
    %c0_2 = arith.constant 0 : index
    %0 = vector.load %arg5[%c0, %c0_0, %c0_1, %c0_2] : memref<1x1x2x128xf32, #tpu.memory_space<vmem>>, vector<1x1x2x128xf32>
    %1 = arith.index_cast %arg1 : i32 to index
    %2 = memref.load %arg3[%1] : memref<3xf32, #tpu.memory_space<smem>>
    %3 = vector.broadcast %2 : f32 to vector<1x1x2x128xf32>
    %4 = arith.mulf %0, %3 : vector<1x1x2x128xf32>
    %5 = arith.index_cast %arg1 : i32 to index
    %6 = memref.load %arg4[%5] : memref<3xf32, #tpu.memory_space<smem>>
    %7 = vector.broadcast %6 : f32 to vector<1x1x2x128xf32>
    %8 = arith.addf %4, %7 : vector<1x1x2x128xf32>
    %c0_3 = arith.constant 0 : index
    %c0_4 = arith.constant 0 : index
    %c0_5 = arith.constant 0 : index
    %c0_6 = arith.constant 0 : index
    %9 = vector.load %arg6[%c0_3, %c0_4, %c0_5, %c0_6] : memref<1x1x2x128xf32, #tpu.memory_space<vmem>>, vector<1x1x2x128xf32>
    tpu.vector_store %arg6[%c0_3, %c0_4, %c0_5, %c0_6], %8 {strides = array<i32>} : memref<1x1x2x128xf32, #tpu.memory_space<vmem>>, vector<1x1x2x128xf32>,
    return
  }
  func.func @transform_0(%arg0: i32, %arg1: i32, %arg2: i32, %arg3: memref<3xf32, #tpu.memory_space<smem>>, %arg4: memref<3xf32, #tpu.memory_space<smem>>) -> (i32, i32, i32, i32) {
    %c0_i32 = arith.constant 0 : i32
    %c0_i32_0 = arith.constant 0 : i32
    return %arg0, %arg1, %arg2, %c0_i32 : i32, i32, i32, i32
  }
  func.func @transform_1(%arg0: i32, %arg1: i32, %arg2: i32, %arg3: memref<3xf32, #tpu.memory_space<smem>>, %arg4: memref<3xf32, #tpu.memory_space<smem>>) -> (i32, i32, i32, i32) {
    %c0_i32 = arith.constant 0 : i32
    %c0_i32_0 = arith.constant 0 : i32
    return %arg0, %arg1, %arg2, %c0_i32 : i32, i32, i32, i32
  }
}

</mosaic_0001>

<llo_original>
// kernel: norm_image.1
$region0: #{norm_image.1}
  #allocation0 [shape = 'u32[]', space=smem, size = 0x4, offset = 0x4, fixed_abs, tag = 'smem constant byte address 0x4 - core index']
  #allocation1 [shape = 'u32[144,128]{1,0:T(1,128)}', space=vmem, size = 0x12000, scoped, tag = 'internal scratch']
  #allocation2 [shape = 's32[1]{0}', space=sflag, size = 0x4, scoped, tag = 'scoped memory for norm_image.1']
  #allocation3 [shape = 'u8[512]{0}', space=smem, size = 0x200, scoped, tag = 'prefetched SMEM operand 0']
  #allocation4 [shape = 'u8[512]{0}', space=smem, size = 0x200, scoped, tag = 'prefetched SMEM operand 1']
  %s0 = inlined_call_operand.vmem [shape: f32[3], index: 0, kind: input, shape index: {}]
  %s1 = inlined_call_operand.vmem [shape: f32[3], index: 1, kind: input, shape index: {}]
  %s2 = inlined_call_operand.vmem [shape: f32[2,3,2,128], index: 2, kind: input, shape index: {}]
  %s3 = inlined_call_operand.vmem [shape: f32[2,3,2,128], index: 3, kind: output, shape index: {}]
  %s4 = sld [smem:[#allocation0]]
  $region37: #{norm_image.1} parent=0
    _
  %s6 = ssub.s32 1, %s4
  %s7 = scalar_select 0, %s6, %s4
  %s8 = sshll.u32 %s0, 4
  %s9 = int_to_ptr.vmem [resolvable:$true] %s8
  %11 = dma.vmem_to_smem %s9, 16, [#allocation3], [#allocation2]
  %s12 = sshll.u32 %s1, 4
  %s13 = int_to_ptr.vmem [resolvable:$true] %s12
  %15 = dma.vmem_to_smem %s13, 16, [#allocation4], [#allocation2]
  %16 = dma.done [#allocation2], 32
  %17 = sfence
  loop: start=0, step=1, limit=8
  $region2: #{norm_image.1} parent=0 // loop_pre_header
    _
  $region3: #{norm_image.1} parent=0 // loop_header
    %s19 = sphi 0, %s23
    %p20 = scmp.ge.s32.totalorder %s19, 8
    %s26 = sphi 0, %s45
    %s27 = sphi 0, %s41
    %s28 = sphi 0, %s37
    %s29 = sphi 0, %s26
    %s30 = sphi 0, %s27
    %s31 = sphi 0, %s28
    %s32 = sphi 0, %s29
    %s33 = sphi 0, %s30
    %s34 = sphi 0, %s31
    %s52 = sphi 0, %s54
    %s55 = sphi 0, %s52
    %s56 = sphi 0, %s55
    %s72 = sphi 0, %s56
    %s82 = sphi 0, %s84
    %s85 = sphi 0, %s82
    %s86 = sphi 0, %s85
    %s102 = sphi 0, %s86
  $region4: #{norm_image.1} parent=0 // loop_header_branch
    %22 = sbr.rel (%p20) target = $region8
  $region5: #{norm_image.1} parent=0 // loop_body
    %s24 = ssub.s32 %s19, 1
    %s25 = ssub.s32 %s19, 2
    %s35 = sadd.s32 1, %s28
    %p36 = scmp.ge.s32.totalorder %s35, 1
    %s37 = scalar_select %p36, 0, %s35
    %s38 = sadd.s32 1, %s27
    %s39 = scalar_select %p36, %s38, %s27
    %p40 = scmp.ge.s32.totalorder %s39, 3
    %s41 = scalar_select %p40, 0, %s39
    %s42 = sadd.s32 1, %s26
    %s43 = scalar_select %p40, %s42, %s26
    %p44 = scmp.ge.s32.totalorder %s43, 2
    %s45 = scalar_select %p44, 0, %s43
    %s46 = ssub.s32 %s26, %s45
    %s47 = ssub.s32 %s27, %s41
    %s48 = sor.u32 %s46, %s47
    %s49 = ssub.s32 %s28, %s37
    %s50 = sor.u32 %s48, %s49
    %p51 = scmp.eq.s32.totalorder %s50, 0
    %s53 = sadd.s32 %s52, 1
    %s54 = scalar_select %p51, %s52, %s53
    %p57 = pneg %p51
    %p58 = scmp.eq.s32.totalorder %s19, 5
    %p59 = por %p57, %p58
    %p60 = scmp.ne.s32.totalorder %s52, %s55
    %p61 = scmp.eq.s32.totalorder %s19, 0
    %p62 = por %p60, %p61
    %p63 = scmp.ne.s32.totalorder %s52, %s55
    %p64 = scmp.eq.s32.totalorder %s24, 5
    %p65 = por %p63, %p64
    %p66 = scmp.ne.s32.totalorder %s55, %s56
    %p67 = scmp.eq.s32.totalorder %s24, 0
    %p68 = por %p66, %p67
    %p69 = scmp.ne.s32.totalorder %s55, %s56
    %p70 = scmp.eq.s32.totalorder %s25, 5
    %p71 = por %p69, %p70
    %p73 = scmp.ne.s32.totalorder %s56, %s72
    %p74 = scmp.eq.s32.totalorder %s25, 0
    %p75 = por %p73, %p74
    %s76 = ssub.s32 %s26, %s45
    %s77 = ssub.s32 %s27, %s41
    %s78 = sor.u32 %s76, %s77
    %s79 = ssub.s32 %s28, %s37
    %s80 = sor.u32 %s78, %s79
    %p81 = scmp.eq.s32.totalorder %s80, 0
    %s83 = sadd.s32 %s82, 1
    %s84 = scalar_select %p81, %s82, %s83
    %p87 = pneg %p81
    %p88 = scmp.eq.s32.totalorder %s19, 5
    %p89 = por %p87, %p88
    %p90 = scmp.ne.s32.totalorder %s82, %s85
    %p91 = scmp.eq.s32.totalorder %s19, 0
    %p92 = por %p90, %p91
    %p93 = scmp.ne.s32.totalorder %s82, %s85
    %p94 = scmp.eq.s32.totalorder %s24, 5
    %p95 = por %p93, %p94
    %p96 = scmp.ne.s32.totalorder %s85, %s86
    %p97 = scmp.eq.s32.totalorder %s24, 0
    %p98 = por %p96, %p97
    %p99 = scmp.ne.s32.totalorder %s85, %s86
    %p100 = scmp.eq.s32.totalorder %s25, 5
    %p101 = por %p99, %p100
    %p103 = scmp.ne.s32.totalorder %s86, %s102
    %p104 = scmp.eq.s32.totalorder %s25, 0
    %p105 = por %p103, %p104
    %p106 = scmp.le.s32.totalorder 1, %s19
    %p107 = scmp.lt.s32.totalorder %s19, 7
    %p108 = pnand %p106, %p107
    %p109 = pneg %p108
    // Predicated region
    $region9: #{norm_image.1} parent=5 // pred_check
      _
    $region10: #{norm_image.1} parent=5 // pred_check_branch
      %111 = sbr.rel (%p108) target = $region12
    $region11: #{norm_image.1} parent=5 // pred_region
      %s112 = ssub.s32 %s19, 1
    $region12: #{norm_image.1} parent=5 // pred_fallthru
      _
    %p113 = scmp.lt.s32.totalorder %s19, 6
    // Predicated region
    $region13: #{norm_image.1} parent=5 // pred_check
      %p114 = pneg %p113
    $region14: #{norm_image.1} parent=5 // pred_check_branch
      %116 = sbr.rel (%p114) target = $region16
    $region15: #{norm_image.1} parent=5 // pred_region
      // Predicated region
      $region17: #{norm_image.1} parent=15 // pred_check
        %p117 = pneg %p62
      $region18: #{norm_image.1} parent=15 // pred_check_branch
        %119 = sbr.rel (%p117) target = $region20
      $region19: #{norm_image.1} parent=15 // pred_region
        %p120 = scmp.lt.s32.totalorder %s26, 1
        %s121 = scalar_select %p120, %s26, 1
        %p122 = scmp.lt.s32.totalorder %s27, 2
        %s123 = scalar_select %p122, %s27, 2
        %p124 = scmp.lt.s32.totalorder %s28, 0
        %s125 = scalar_select %p124, %s28, 0
        %s126 = sadd.s32 %s125, %s123
        %s127 = smul.addr %s121, 3
        %s128 = sadd.s32 %s126, %s127
        %s129 = smul.addr %s128, 2
        %s130 = scalar_lea.vmem %s2, %s129
      $region20: #{norm_image.1} parent=15 // pred_fallthru
        _
    $region16: #{norm_image.1} parent=5 // pred_fallthru
      _
    %p131 = scmp.le.s32.totalorder 1, %s19
    %p132 = scmp.lt.s32.totalorder %s19, 7
    %p133 = pnand %p131, %p132
    %p134 = pneg %p133
    // Predicated region
    $region21: #{norm_image.1} parent=5 // pred_check
      _
    $region22: #{norm_image.1} parent=5 // pred_check_branch
      %136 = sbr.rel (%p133) target = $region24
    $region23: #{norm_image.1} parent=5 // pred_region
      %s137 = ssub.s32 %s19, 1
      %p138 = scmp.lt.s32.totalorder %s29, 1
      %s139 = scalar_select %p138, %s29, 1
      %p140 = scmp.lt.s32.totalorder %s30, 2
      %s141 = scalar_select %p140, %s30, 2
      %p142 = scmp.lt.s32.totalorder %s31, 0
      %s143 = scalar_select %p142, %s31, 0
      %s144 = sadd.s32 %s143, %s141
      %s145 = smul.addr %s139, 3
      %s146 = sadd.s32 %s144, %s145
      %s147 = smul.addr %s146, 2
      %s148 = scalar_lea.vmem %s2, %s147
      %p149 = pneg %p68
      %p150 = pneg %p65
      %p151 = pneg %p98
      %p152 = pneg %p95
      %p153 = scmp.lt.s32.totalorder %s29, 1
      %s154 = scalar_select %p153, %s29, 1
      %p155 = scmp.lt.s32.totalorder %s30, 2
      %s156 = scalar_select %p155, %s30, 2
      %p157 = scmp.lt.s32.totalorder %s31, 0
      %s158 = scalar_select %p157, %s31, 0
      %s159 = sadd.s32 %s158, %s156
      %s160 = smul.addr %s154, 3
      %s161 = sadd.s32 %s159, %s160
      %s162 = smul.addr %s161, 2
      %s163 = scalar_lea.vmem %s3, %s162
      %p164 = scmp.lt.s32.totalorder %s29, 1
      %s165 = scalar_select %p164, %s29, 1
      %p166 = scmp.lt.s32.totalorder %s30, 2
      %s167 = scalar_select %p166, %s30, 2
      %p168 = scmp.lt.s32.totalorder %s31, 0
      %s169 = scalar_select %p168, %s31, 0
      %s170 = sadd.s32 %s169, %s167
      %s171 = smul.addr %s165, 3
      %s172 = sadd.s32 %s170, %s171
      %s173 = smul.addr %s172, 2
      %s174 = scalar_lea.vmem %s2, %s173
      %p175 = scmp.lt.s32.totalorder %s29, 1
      %s176 = scalar_select %p175, %s29, 1
      %p177 = scmp.lt.s32.totalorder %s30, 2
      %s178 = scalar_select %p177, %s30, 2
      %p179 = scmp.lt.s32.totalorder %s31, 0
      %s180 = scalar_select %p179, %s31, 0
      %s181 = sadd.s32 %s180, %s178
      %s182 = smul.addr %s176, 3
      %s183 = sadd.s32 %s181, %s182
      %s184 = smul.addr %s183, 2
      %s185 = scalar_lea.vmem %s3, %s184
      %v186 = vld [vmem:[%s174] sm:$0x3]
      %s187 = sld [smem:[#allocation3 + %s30]]
      %v188 = vstv %s187
      %v189 = vmul.f32 %v186, %v188
      %s190 = sld [smem:[#allocation4 + %s30]]
      %v191 = vstv %s190
      %v192 = vadd.f32 %v189, %v191
      %193 = vst [vmem:[%s185] sm:$0x3] %v192
      %p194 = scmp.lt.s32.totalorder %s29, 1
      %s195 = scalar_select %p194, %s29, 1
      %p196 = scmp.lt.s32.totalorder %s30, 2
      %s197 = scalar_select %p196, %s30, 2
      %p198 = scmp.lt.s32.totalorder %s31, 0
      %s199 = scalar_select %p198, %s31, 0
      %s200 = sadd.s32 %s199, %s197
      %s201 = smul.addr %s195, 3
      %s202 = sadd.s32 %s200, %s201
      %s203 = smul.addr %s202, 2
      %s204 = scalar_lea.vmem %s3, %s203
      // Predicated region
      $region25: #{norm_image.1} parent=23 // pred_check
        %p205 = pneg %p95
      $region26: #{norm_image.1} parent=23 // pred_check_branch
        %207 = sbr.rel (%p205) target = $region28
      $region27: #{norm_image.1} parent=23 // pred_region
        _
      $region28: #{norm_image.1} parent=23 // pred_fallthru
        _
    $region24: #{norm_image.1} parent=5 // pred_fallthru
      _
    %p208 = scmp.le.s32.totalorder 2, %s19
    // Predicated region
    $region29: #{norm_image.1} parent=5 // pred_check
      %p209 = pneg %p208
    $region30: #{norm_image.1} parent=5 // pred_check_branch
      %211 = sbr.rel (%p209) target = $region32
    $region31: #{norm_image.1} parent=5 // pred_region
      %s212 = ssub.s32 %s19, 2
      // Predicated region
      $region33: #{norm_image.1} parent=31 // pred_check
        %p213 = pneg %p101
      $region34: #{norm_image.1} parent=31 // pred_check_branch
        %215 = sbr.rel (%p213) target = $region36
      $region35: #{norm_image.1} parent=31 // pred_region
        %p216 = scmp.lt.s32.totalorder %s32, 1
        %s217 = scalar_select %p216, %s32, 1
        %p218 = scmp.lt.s32.totalorder %s33, 2
        %s219 = scalar_select %p218, %s33, 2
        %p220 = scmp.lt.s32.totalorder %s34, 0
        %s221 = scalar_select %p220, %s34, 0
        %s222 = sadd.s32 %s221, %s219
        %s223 = smul.addr %s217, 3
        %s224 = sadd.s32 %s222, %s223
        %s225 = smul.addr %s224, 2
        %s226 = scalar_lea.vmem %s3, %s225
      $region36: #{norm_image.1} parent=31 // pred_fallthru
        _
    $region32: #{norm_image.1} parent=5 // pred_fallthru
      _
  $region6: #{norm_image.1} parent=0 // loop_footer
    %s23 = sadd.s32 1, %s19
  $region7: #{norm_image.1} parent=0 // loop_footer_branch
    %18 = sbr.rel target = $region3
  $region8: #{norm_image.1} parent=0 // loop_exit
    _

</llo_original>
